<compile_context>
chip_gen: v5e
topology: v5e:2x2
jax: 0.10.0
libtpu: 0.0.40
codegen_flags: <defaults>
</compile_context>

<pallas_src>
import jax
import jax.numpy as jnp
from jax.experimental import pallas as pl
from jax.experimental.pallas import tpu as pltpu


def _round_up(n, m):
    return ((n + m - 1) // m) * m


def _ff_kernel(x_ref, w1_ref, b1_ref, w2_ref, b2_ref, w3_ref, b3_ref, o_ref):
    # fc1 + ReLU  (bf16 x bf16 -> f32 accumulation on the MXU)
    h1 = jnp.dot(x_ref[...], w1_ref[...], preferred_element_type=jnp.float32)
    h1 = jnp.maximum(h1 + b1_ref[...], 0.0)
    # fc2 + ReLU
    h2 = jnp.dot(h1.astype(jnp.bfloat16), w2_ref[...],
                 preferred_element_type=jnp.float32)
    h2 = jnp.maximum(h2 + b2_ref[...], 0.0)
    # fc3 + sigmoid (exp and approx reciprocal both go to the otherwise-idle EUP)
    h3 = jnp.dot(h2.astype(jnp.bfloat16), w3_ref[...],
                 preferred_element_type=jnp.float32)
    h3 = h3 + b3_ref[...]
    o_ref[...] = pl.reciprocal(1.0 + jnp.exp(-h3), approx=True).astype(o_ref.dtype)


def feedforward(x, params, *, tile_b=4096):
    """x: [B, input_size] float32 -> [B, 1] float32."""
    w1, b1, w2, b2, w3, b3 = params
    B, in_dim = x.shape

    # Batch tile: large enough to amortize the ~0.35 us per-grid-step overhead
    # (per-step time here is MXU-cadence dominated anyway), small enough that
    # the lane-padded 1-wide output buffers + f32 intermediates stay well under
    # the default scoped-VMEM limit on v5e/v6e/v7x.
    tile_b = min(tile_b, _round_up(B, 8))
    b_pad = _round_up(B, tile_b)

    # bf16 streaming for the memory-bound operands; biases stay f32.
    xb = x.astype(jnp.bfloat16)
    if b_pad != B:
        xb = jnp.pad(xb, ((0, b_pad - B), (0, 0)))
    w1b = w1.astype(jnp.bfloat16)
    w2b = w2.astype(jnp.bfloat16)
    w3b = w3.astype(jnp.bfloat16)

    grid = (b_pad // tile_b,)
    const = lambda i: (0, 0)  # same block every step -> VMEM-resident operand

    out = pl.pallas_call(
        _ff_kernel,
        out_shape=jax.ShapeDtypeStruct((b_pad, 1), jnp.float32),
        grid=grid,
        in_specs=[
            pl.BlockSpec((tile_b, in_dim), lambda i: (i, 0)),
            pl.BlockSpec(w1b.shape, const),
            pl.BlockSpec(b1.shape, const),
            pl.BlockSpec(w2b.shape, const),
            pl.BlockSpec(b2.shape, const),
            pl.BlockSpec(w3b.shape, const),
            pl.BlockSpec(b3.shape, const),
        ],
        out_specs=pl.BlockSpec((tile_b, 1), lambda i: (i, 0)),
        compiler_params=pltpu.CompilerParams(
            dimension_semantics=("parallel",),  # megacore sharding on v7x
        ),
    )(xb, w1b, b1, w2b, b2, w3b, b3)
    return out[:B]


def init_params(key, input_size, hidden_size):
    """Deterministic init mimicking torch.nn.Linear defaults (U[-1/sqrt(fan_in), +])."""
    def linear(k, fan_in, fan_out):
        kw, kb = jax.random.split(k)
        bound = 1.0 / jnp.sqrt(fan_in)
        # stored as [fan_in, fan_out]  (i.e. torch weight transposed)
        w = jax.random.uniform(kw, (fan_in, fan_out), jnp.float32, -bound, bound)
        b = jax.random.uniform(kb, (1, fan_out), jnp.float32, -bound, bound)
        return w, b

    k1, k2, k3 = jax.random.split(key, 3)
    w1, b1 = linear(k1, input_size, hidden_size)
    w2, b2 = linear(k2, hidden_size, 10)
    w3, b3 = linear(k3, 10, 1)
    return (w1, b1, w2, b2, w3, b3)


def feedforward_ref_f32(x, params):
    """Pure-f32 reference (original module semantics)."""
    w1, b1, w2, b2, w3, b3 = params
    h = jnp.maximum(x @ w1 + b1, 0.0)
    h = jnp.maximum(h @ w2 + b2, 0.0)
    return jax.nn.sigmoid(h @ w3 + b3)


def feedforward_ref_mixed(x, params):
    """Reference replicating the kernel's bf16-matmul / f32-epilogue scheme."""
    w1, b1, w2, b2, w3, b3 = params
    bf = jnp.bfloat16
    h = jnp.dot(x.astype(bf), w1.astype(bf), preferred_element_type=jnp.float32)
    h = jnp.maximum(h + b1, 0.0)
    h = jnp.dot(h.astype(bf), w2.astype(bf), preferred_element_type=jnp.float32)
    h = jnp.maximum(h + b2, 0.0)
    h = jnp.dot(h.astype(bf), w3.astype(bf), preferred_element_type=jnp.float32)
    return jax.nn.sigmoid(h + b3)


if __name__ == "__main__":
    input_size = 32
    hidden_size = 32
    batch = 8

    key = jax.random.PRNGKey(0)
    kx, kp = jax.random.split(key)
    x = jax.random.normal(kx, (batch, input_size), jnp.float32)
    params = init_params(kp, input_size, hidden_size)

    out = jax.block_until_ready(feedforward(x, params))
    assert out.shape == (batch, 1), out.shape

    ref_mixed = feedforward_ref_mixed(x, params)
    ref_f32 = feedforward_ref_f32(x, params)
    assert jnp.allclose(out, ref_mixed, atol=1e-2, rtol=0.0), (out, ref_mixed)
    assert jnp.allclose(out, ref_f32, atol=5e-2, rtol=0.0), (out, ref_f32)

    # Exercise the batch-padding path (batch not a multiple of the tile/8).
    x2 = jax.random.normal(jax.random.PRNGKey(1), (37, input_size), jnp.float32)
    out2 = jax.block_until_ready(feedforward(x2, params))
    assert out2.shape == (37, 1), out2.shape
    assert jnp.allclose(out2, feedforward_ref_mixed(x2, params), atol=1e-2, rtol=0.0)

    print("KERNEL_OK")
</pallas_src>

<mosaic_0001>
module attributes {stable_mosaic.version = 11 : i64} {
  func.func @_ff_kernel(%arg0: i32, %arg1: memref<8x32xbf16, #tpu.memory_space<vmem>>, %arg2: memref<32x32xbf16, #tpu.memory_space<vmem>>, %arg3: memref<1x32xf32, #tpu.memory_space<vmem>>, %arg4: memref<32x10xbf16, #tpu.memory_space<vmem>>, %arg5: memref<1x10xf32, #tpu.memory_space<vmem>>, %arg6: memref<10x1xbf16, #tpu.memory_space<vmem>>, %arg7: memref<1x1xf32, #tpu.memory_space<vmem>>, %arg8: memref<8x1xf32, #tpu.memory_space<vmem>>) attributes {dimension_semantics = [#tpu.dimension_semantics<parallel>], iteration_bounds = array<i64: 1>, scalar_prefetch = 0 : i64, scratch_operands = 0 : i64, tpu.core_type = #tpu.core_type<tc>, window_params = [{transform_indices = @transform_0, window_bounds = array<i64: 8, 32>}, {pipeline_mode = #tpu.pipeline_mode<synchronous>, transform_indices = @transform_1, window_bounds = array<i64: 32, 32>}, {pipeline_mode = #tpu.pipeline_mode<synchronous>, transform_indices = @transform_2, window_bounds = array<i64: 1, 32>}, {pipeline_mode = #tpu.pipeline_mode<synchronous>, transform_indices = @transform_3, window_bounds = array<i64: 32, 10>}, {pipeline_mode = #tpu.pipeline_mode<synchronous>, transform_indices = @transform_4, window_bounds = array<i64: 1, 10>}, {pipeline_mode = #tpu.pipeline_mode<synchronous>, transform_indices = @transform_5, window_bounds = array<i64: 10, 1>}, {pipeline_mode = #tpu.pipeline_mode<synchronous>, transform_indices = @transform_6, window_bounds = array<i64: 1, 1>}, {transform_indices = @transform_7, window_bounds = array<i64: 8, 1>}]} {
    %c0 = arith.constant 0 : index
    %c0_0 = arith.constant 0 : index
    %0 = vector.load %arg1[%c0, %c0_0] : memref<8x32xbf16, #tpu.memory_space<vmem>>, vector<8x32xbf16>
    %c0_1 = arith.constant 0 : index
    %c0_2 = arith.constant 0 : index
    %1 = vector.load %arg2[%c0_1, %c0_2] : memref<32x32xbf16, #tpu.memory_space<vmem>>, vector<32x32xbf16>
    %cst = arith.constant dense<0.000000e+00> : vector<8x32xf32>
    %2 = tpu.matmul %0, %1, %cst {dimension_numbers = #tpu.dot_dimension_numbers<[1], [0], [0], [1], [0, 0, 1, 1], [], []>} : vector<8x32xbf16>, vector<32x32xbf16>, vector<8x32xf32> -> vector<8x32xf32>
    %c0_3 = arith.constant 0 : index
    %c0_4 = arith.constant 0 : index
    %3 = vector.load %arg3[%c0_3, %c0_4] : memref<1x32xf32, #tpu.memory_space<vmem>>, vector<1x32xf32>
    %4 = vector.broadcast %3 : vector<1x32xf32> to vector<8x32xf32>
    %5 = arith.addf %2, %4 : vector<8x32xf32>
    %cst_5 = arith.constant 0.000000e+00 : f32
    %6 = vector.broadcast %cst_5 : f32 to vector<8x32xf32>
    %7 = arith.maximumf %5, %6 : vector<8x32xf32>
    %8 = arith.truncf %7 : vector<8x32xf32> to vector<8x32xbf16>
    %c0_6 = arith.constant 0 : index
    %c0_7 = arith.constant 0 : index
    %9 = vector.load %arg4[%c0_6, %c0_7] : memref<32x10xbf16, #tpu.memory_space<vmem>>, vector<32x10xbf16>
    %cst_8 = arith.constant dense<0.000000e+00> : vector<8x10xf32>
    %10 = tpu.matmul %8, %9, %cst_8 {dimension_numbers = #tpu.dot_dimension_numbers<[1], [0], [0], [1], [0, 0, 1, 1], [], []>} : vector<8x32xbf16>, vector<32x10xbf16>, vector<8x10xf32> -> vector<8x10xf32>
    %c0_9 = arith.constant 0 : index
    %c0_10 = arith.constant 0 : index
    %11 = vector.load %arg5[%c0_9, %c0_10] : memref<1x10xf32, #tpu.memory_space<vmem>>, vector<1x10xf32>
    %12 = vector.broadcast %11 : vector<1x10xf32> to vector<8x10xf32>
    %13 = arith.addf %10, %12 : vector<8x10xf32>
    %cst_11 = arith.constant 0.000000e+00 : f32
    %14 = vector.broadcast %cst_11 : f32 to vector<8x10xf32>
    %15 = arith.maximumf %13, %14 : vector<8x10xf32>
    %16 = arith.truncf %15 : vector<8x10xf32> to vector<8x10xbf16>
    %c0_12 = arith.constant 0 : index
    %c0_13 = arith.constant 0 : index
    %17 = vector.load %arg6[%c0_12, %c0_13] : memref<10x1xbf16, #tpu.memory_space<vmem>>, vector<10x1xbf16>
    %cst_14 = arith.constant dense<0.000000e+00> : vector<8x1xf32>
    %18 = tpu.matmul %16, %17, %cst_14 {dimension_numbers = #tpu.dot_dimension_numbers<[1], [0], [0], [1], [0, 0, 1, 1], [], []>} : vector<8x10xbf16>, vector<10x1xbf16>, vector<8x1xf32> -> vector<8x1xf32>
    %c0_15 = arith.constant 0 : index
    %c0_16 = arith.constant 0 : index
    %19 = vector.load %arg7[%c0_15, %c0_16] : memref<1x1xf32, #tpu.memory_space<vmem>>, vector<1x1xf32>
    %20 = vector.broadcast %19 : vector<1x1xf32> to vector<8x1xf32>
    %21 = arith.addf %18, %20 : vector<8x1xf32>
    %cst_17 = arith.constant 0.000000e+00 : f32
    %22 = vector.broadcast %cst_17 : f32 to vector<8x1xf32>
    %23 = arith.subf %22, %21 : vector<8x1xf32>
    %24 = math.exp %23 : vector<8x1xf32>
    %cst_18 = arith.constant 1.000000e+00 : f32
    %25 = vector.broadcast %cst_18 : f32 to vector<8x1xf32>
    %26 = arith.addf %25, %24 : vector<8x1xf32>
    %27 = tpu.reciprocal %26 {approx = true} : vector<8x1xf32> -> vector<8x1xf32>
    %c0_19 = arith.constant 0 : index
    %c0_20 = arith.constant 0 : index
    %28 = vector.load %arg8[%c0_19, %c0_20] : memref<8x1xf32, #tpu.memory_space<vmem>>, vector<8x1xf32>
    tpu.vector_store %arg8[%c0_19, %c0_20], %27 {strides = array<i32>} : memref<8x1xf32, #tpu.memory_space<vmem>>, vector<8x1xf32>,
    return
  }
  func.func @transform_0(%arg0: i32) -> (i32, i32) {
    %c0_i32 = arith.constant 0 : i32
    %c0_i32_0 = arith.constant 0 : i32
    return %arg0, %c0_i32 : i32, i32
  }
  func.func @transform_1(%arg0: i32) -> (i32, i32) {
    %c0_i32 = arith.constant 0 : i32
    %c0_i32_0 = arith.constant 0 : i32
    %c0_i32_1 = arith.constant 0 : i32
    return %c0_i32, %c0_i32_0 : i32, i32
  }
  func.func @transform_2(%arg0: i32) -> (i32, i32) {
    %c0_i32 = arith.constant 0 : i32
    %c0_i32_0 = arith.constant 0 : i32
    %c0_i32_1 = arith.constant 0 : i32
    return %c0_i32, %c0_i32_0 : i32, i32
  }
  func.func @transform_3(%arg0: i32) -> (i32, i32) {
    %c0_i32 = arith.constant 0 : i32
    %c0_i32_0 = arith.constant 0 : i32
    %c0_i32_1 = arith.constant 0 : i32
    return %c0_i32, %c0_i32_0 : i32, i32
  }
  func.func @transform_4(%arg0: i32) -> (i32, i32) {
    %c0_i32 = arith.constant 0 : i32
    %c0_i32_0 = arith.constant 0 : i32
    %c0_i32_1 = arith.constant 0 : i32
    return %c0_i32, %c0_i32_0 : i32, i32
  }
  func.func @transform_5(%arg0: i32) -> (i32, i32) {
    %c0_i32 = arith.constant 0 : i32
    %c0_i32_0 = arith.constant 0 : i32
    %c0_i32_1 = arith.constant 0 : i32
    return %c0_i32, %c0_i32_0 : i32, i32
  }
  func.func @transform_6(%arg0: i32) -> (i32, i32) {
    %c0_i32 = arith.constant 0 : i32
    %c0_i32_0 = arith.constant 0 : i32
    %c0_i32_1 = arith.constant 0 : i32
    return %c0_i32, %c0_i32_0 : i32, i32
  }
  func.func @transform_7(%arg0: i32) -> (i32, i32) {
    %c0_i32 = arith.constant 0 : i32
    %c0_i32_0 = arith.constant 0 : i32
    return %arg0, %c0_i32 : i32, i32
  }
}

</mosaic_0001>

<llo_original>
// kernel: tpu_custom_call.1
$region0: #{tpu_custom_call.1}
  #allocation0 [shape = 'u32[]', space=smem, size = 0x4, offset = 0x4, fixed_abs, tag = 'smem constant byte address 0x4 - core index']
  #allocation1 [shape = 'u32[72,128]{1,0:T(1,128)}', space=vmem, size = 0x9000, scoped, tag = 'internal scratch']
  #allocation2 [shape = 'f32[1,1]{1,0:T(1,128)S(1)}', space=vmem, size = 0x200, scoped, tag = 'scoped memory for tpu_custom_call.1']
  %s0 = inlined_call_operand.vmem [shape: bf16[8,32], index: 0, kind: input, shape index: {}]
  %s1 = inlined_call_operand.vmem [shape: bf16[32,32], index: 1, kind: input, shape index: {}]
  %s2 = inlined_call_operand.vmem [shape: f32[1,32], index: 2, kind: input, shape index: {}]
  %s3 = inlined_call_operand.vmem [shape: bf16[32,10], index: 3, kind: input, shape index: {}]
  %s4 = inlined_call_operand.vmem [shape: f32[1,10], index: 4, kind: input, shape index: {}]
  %s5 = inlined_call_operand.vmem [shape: bf16[10,1], index: 5, kind: input, shape index: {}]
  %s6 = inlined_call_operand.<no memory space> [shape: f32[1,1], index: 6, kind: input, shape index: {}]
  %s7 = inlined_call_operand.vmem [shape: f32[8,1], index: 7, kind: output, shape index: {}]
  %s8 = sld [smem:[#allocation0]]
  $region38: #{tpu_custom_call.1} parent=0
    _
  %s10 = ssub.s32 1, %s8
  %s11 = scalar_select 0, %s10, %s8
  %v12 = vstv %s6
  %13 = vst [vmem:[#allocation2] sm:$0x1] %v12
  // Predicated region
  $region2: #{tpu_custom_call.1} parent=0 // pred_check
    _
  $region3: #{tpu_custom_call.1} parent=0 // pred_check_branch
    %15 = sbr.rel (0) target = $region5
  $region4: #{tpu_custom_call.1} parent=0 // pred_region
    _
  $region5: #{tpu_custom_call.1} parent=0 // pred_fallthru
    _
  // Predicated region
  $region6: #{tpu_custom_call.1} parent=0 // pred_check
    _
  $region7: #{tpu_custom_call.1} parent=0 // pred_check_branch
    %17 = sbr.rel (0) target = $region9
  $region8: #{tpu_custom_call.1} parent=0 // pred_region
    _
  $region9: #{tpu_custom_call.1} parent=0 // pred_fallthru
    _
  // Predicated region
  $region10: #{tpu_custom_call.1} parent=0 // pred_check
    _
  $region11: #{tpu_custom_call.1} parent=0 // pred_check_branch
    %19 = sbr.rel (0) target = $region13
  $region12: #{tpu_custom_call.1} parent=0 // pred_region
    _
  $region13: #{tpu_custom_call.1} parent=0 // pred_fallthru
    _
  // Predicated region
  $region14: #{tpu_custom_call.1} parent=0 // pred_check
    _
  $region15: #{tpu_custom_call.1} parent=0 // pred_check_branch
    %21 = sbr.rel (0) target = $region17
  $region16: #{tpu_custom_call.1} parent=0 // pred_region
    _
  $region17: #{tpu_custom_call.1} parent=0 // pred_fallthru
    _
  // Predicated region
  $region18: #{tpu_custom_call.1} parent=0 // pred_check
    _
  $region19: #{tpu_custom_call.1} parent=0 // pred_check_branch
    %23 = sbr.rel (0) target = $region21
  $region20: #{tpu_custom_call.1} parent=0 // pred_region
    _
  $region21: #{tpu_custom_call.1} parent=0 // pred_fallthru
    _
  // Predicated region
  $region22: #{tpu_custom_call.1} parent=0 // pred_check
    _
  $region23: #{tpu_custom_call.1} parent=0 // pred_check_branch
    %25 = sbr.rel (0) target = $region25
  $region24: #{tpu_custom_call.1} parent=0 // pred_region
    _
  $region25: #{tpu_custom_call.1} parent=0 // pred_fallthru
    _
  // Predicated region
  $region26: #{tpu_custom_call.1} parent=0 // pred_check
    _
  $region27: #{tpu_custom_call.1} parent=0 // pred_check_branch
    %27 = sbr.rel (0) target = $region29
  $region28: #{tpu_custom_call.1} parent=0 // pred_region
    _
  $region29: #{tpu_custom_call.1} parent=0 // pred_fallthru
    _
  %v29 = vld [vmem:[%s0] sm:$0xf]
  %v30 = vld [vmem:[%s1] sm:$0xf]
  %v31 = vld [vmem:[%s1 + $0x4] sm:$0xf]
  %v32 = vld [vmem:[%s1 + $0x8] sm:$0xf]
  %v33 = vld [vmem:[%s1 + $0xc] sm:$0xf]
  %v34 = vld [vmem:[%s2] sm:$0x1]
  %v36 = vperm.slane %v34, 0
  %v42 = vunpack.c.l.b16 %v30
  %v43 = vunpack.c.l.b16 %v31
  %v44 = vunpack.c.l.b16 %v32
  %v45 = vunpack.c.l.b16 %v33
  %v46 = vpack.c.b16 %v43, %v42
  %v47 = vpack.c.b16 %v45, %v44
  %vm50 = vcmask 261120
  %v52 = vsel %vm50, %v29, 0
  %54 = vmatpush.bf16.msra.mxu0 0
  %55 = vmatpush.bf16.msra.mxu0 0
  %56 = vmatpush.bf16.msra.mxu0 0
  %57 = vmatpush.bf16.msra.mxu0 0
  %58 = vmatpush.bf16.msra.mxu0 0
  %59 = vmatpush.bf16.msra.mxu0 0
  %60 = vmatpush.bf16.msra.mxu0 %v47
  %61 = vmatpush.bf16.msra.mxu0 %v46
  %62 = vmatmul.bf16.gmra.mxu0 %v52
  %v63 = vpop.f32.mrf.mxu0
  %v64 = vadd.f32 %v36, %v63
  %v65 = vpop.f32.mrf.mxu0
  %66 = vdwg.mxu0
  %v67 = vmax.f32 %v64, 0.0
  %v68 = vpack.c.bf16 %v67, %v67
  %v69 = vld [vmem:[%s3] sm:$0xf]
  %v70 = vld [vmem:[%s3 + $0x4] sm:$0xf]
  %v71 = vld [vmem:[%s3 + $0x8] sm:$0xf]
  %v72 = vld [vmem:[%s3 + $0xc] sm:$0xf]
  %v73 = vld [vmem:[%s4] sm:$0x1]
  %v75 = vperm.slane %v73, 0
  %v81 = vunpack.c.l.b16 %v69
  %v82 = vunpack.c.l.b16 %v70
  %v83 = vunpack.c.l.b16 %v71
  %v84 = vunpack.c.l.b16 %v72
  %v85 = vpack.c.b16 %v82, %v81
  %v86 = vpack.c.b16 %v84, %v83
  %v90 = vsel %vm50, %v68, 0
  %92 = vmatpush.bf16.msra.mxu0 0
  %93 = vmatpush.bf16.msra.mxu0 0
  %94 = vmatpush.bf16.msra.mxu0 0
  %95 = vmatpush.bf16.msra.mxu0 0
  %96 = vmatpush.bf16.msra.mxu0 0
  %97 = vmatpush.bf16.msra.mxu0 0
  %98 = vmatpush.bf16.msra.mxu0 %v86
  %99 = vmatpush.bf16.msra.mxu0 %v85
  %100 = vmatmul.bf16.gmra.mxu0 %v90
  %v101 = vpop.f32.mrf.mxu0
  %v102 = vadd.f32 %v75, %v101
  %v103 = vpop.f32.mrf.mxu0
  %104 = vdwg.mxu0
  %v105 = vmax.f32 %v102, 0.0
  %v106 = vpack.c.bf16 %v105, %v105
  %v107 = vld [vmem:[%s5] sm:$0xf]
  %v108 = vld [vmem:[%s5 + $0x4] sm:$0x1]
  %v109 = vld [vmem:[#allocation2] sm:$0x1]
  %v111 = vperm.slane %v109, 0
  %v115 = vunpack.c.l.b16 %v107
  %v116 = vunpack.c.l.b16 %v108
  %v117 = vpack.c.b16 %v116, %v115
  %vm118 = vcmask 80896
  %v120 = vsel %vm118, %v106, 0
  %vm122 = vcmask 1044480
  %v124 = vsel %vm122, %v117, 0
  %126 = vmatpush.bf16.msra.mxu0 0
  %127 = vmatpush.bf16.msra.mxu0 0
  %128 = vmatpush.bf16.msra.mxu0 0
  %129 = vmatpush.bf16.msra.mxu0 0
  %130 = vmatpush.bf16.msra.mxu0 0
  %131 = vmatpush.bf16.msra.mxu0 0
  %132 = vmatpush.bf16.msra.mxu0 0
  %133 = vmatpush.bf16.msra.mxu0 %v124
  %134 = vmatmul.bf16.gmra.mxu0 %v120
  %v135 = vpop.f32.mrf.mxu0
  %v136 = vadd.f32 %v111, %v135
  %v137 = vpop.f32.mrf.mxu0
  %138 = vdwg.mxu0
  %v139 = vsub.f32 0.0, %v136
  %v140 = vmul.f32 %v139, 1.442695
  %v141 = vpow.pop %v140
  %v142 = vadd.f32 %v141, 1.0
  %v143 = vrcp.pop %v142
  %vm144 = vcmask 7168
  %145 = vst.msk [vmem:[%s7] sm:$0xff] %vm144, %v143
  // Predicated region
  $region30: #{tpu_custom_call.1} parent=0 // pred_check
    _
  $region31: #{tpu_custom_call.1} parent=0 // pred_check_branch
    %147 = sbr.rel (0) target = $region33
  $region32: #{tpu_custom_call.1} parent=0 // pred_region
    _
  $region33: #{tpu_custom_call.1} parent=0 // pred_fallthru
    _
  // Predicated region
  $region34: #{tpu_custom_call.1} parent=0 // pred_check
    _
  $region35: #{tpu_custom_call.1} parent=0 // pred_check_branch
    %149 = sbr.rel (0) target = $region37
  $region36: #{tpu_custom_call.1} parent=0 // pred_region
    _
  $region37: #{tpu_custom_call.1} parent=0 // pred_fallthru
    _

</llo_original>
